<compile_context>
chip_gen: v6e
topology: v6e:2x2x1
jax: 0.10.0
libtpu: 0.0.40
codegen_flags: <defaults>
</compile_context>

<pallas_src>
import functools

import jax
import jax.numpy as jnp
from jax import lax
from jax.experimental import pallas as pl
from jax.experimental.pallas import tpu as pltpu


def _apply_act(y, act):
    """Activation applied inside the kernel (matches `eval(act)` in PyTorch)."""
    if act is None or act == "nn.Identity()":
        return y
    if act == "nn.ReLU()":
        return jnp.maximum(y, 0.0)
    if act == "nn.SiLU()":
        return y * jax.nn.sigmoid(y)
    if act == "nn.GELU()":
        # PyTorch nn.GELU() default is the exact erf form.
        return jax.nn.gelu(y, approximate=False)
    if act == "nn.Tanh()":
        return jnp.tanh(y)
    if act == "nn.Sigmoid()":
        return jax.nn.sigmoid(y)
    # TODO(synk): arbitrary `eval(act)` strings beyond the common cases are not
    # translatable to a static kernel; refuse rather than silently change math.
    raise ValueError(f"Unsupported activation string for Pallas kernel: {act!r}")


def _linear_kernel(x_ref, w_ref, b_ref, o_ref, acc_ref, *, act, k_rem,
                   compute_dtype):
    # x_ref:   [tm, tk]  input tile
    # w_ref:   [tk, tn]  weight tile, already in [K, N] layout (canonical RHS)
    # b_ref:   [1,  tn]  bias panel
    # o_ref:   [tm, tn]  output tile
    # acc_ref: [tm, tn]  f32 accumulator (persists across the K grid axis)
    k = pl.program_id(2)
    nk = pl.num_programs(2)

    @pl.when(k == 0)
    def _init():
        acc_ref[...] = jnp.zeros_like(acc_ref)

    def partial_dot(mask_tail):
        x = x_ref[...]
        w = w_ref[...]
        if mask_tail:
            # Zero the K tail of BOTH operands so stale VMEM (possibly inf/nan)
            # in the partial edge block cannot corrupt the reduction.
            kx = lax.broadcasted_iota(jnp.int32, x.shape, 1)
            x = jnp.where(kx < k_rem, x, jnp.zeros_like(x))
            kw = lax.broadcasted_iota(jnp.int32, w.shape, 0)
            w = jnp.where(kw < k_rem, w, jnp.zeros_like(w))
        if compute_dtype is not None:
            x = x.astype(compute_dtype)
            w = w.astype(compute_dtype)
        return jnp.dot(x, w, preferred_element_type=jnp.float32)

    @pl.when(k < nk - 1)
    def _accumulate():
        acc_ref[...] += partial_dot(False)

    @pl.when(k == nk - 1)
    def _finalize():
        # Fuse last partial dot + bias + activation; avoids one acc round trip.
        y = acc_ref[...] + partial_dot(k_rem != 0)
        y = y + b_ref[...].astype(jnp.float32)
        y = _apply_act(y, act)
        o_ref[...] = y.astype(o_ref.dtype)


def _cdiv(a: int, b: int) -> int:
    return (a + b - 1) // b


def prepare_linear_params(weight, bias):
    """One-time (parameter-bind time) prep: PyTorch [N, K] weight -> [K, N]."""
    N, K = weight.shape
    assert bias.shape == (N,)
    return jnp.asarray(weight).T, jnp.asarray(bias).reshape(1, N)


def lazy_linear_prepared(x, w_kn, b2, act=None, *, tm: int = 512, tn: int = 512,
                         tk: int | None = None, compute_dtype=None):
    """x: [..., K]; w_kn: [K, N] (pre-transposed); b2: [1, N]. Returns [..., N]."""
    K, N = w_kn.shape
    assert x.shape[-1] == K
    assert b2.shape == (1, N)

    lead = x.shape[:-1]
    x2d = x.reshape(-1, K)
    M = x2d.shape[0]

    if tk is None:
        tk = 2048 if x.dtype == jnp.bfloat16 else 1024

    # Tile selection: use the full dim when it fits inside the preferred tile
    # (block == array dim is always legal layout-wise); otherwise the preferred
    # size (multiples of 256 -> full-width panels for v6e/v7x 256x256 MXU).
    tm = M if M <= tm else tm
    tn = N if N <= tn else tn
    tk = K if K <= tk else tk

    gm, gn, gk = _cdiv(M, tm), _cdiv(N, tn), _cdiv(K, tk)
    # v7x has 2 TensorCores: make the "parallel" axes yield >= 2 blocks when
    # the N axis is wide enough to stay lane-dense.
    if gm * gn < 2 and N >= 256:
        tn = max(128, ((_cdiv(N, 2) + 127) // 128) * 128)
        gn = _cdiv(N, tn)

    k_rem = K % tk  # only the last K block can be partial (masked in-kernel)

    xi = jnp.dtype(x.dtype).itemsize
    wi = jnp.dtype(w_kn.dtype).itemsize
    bi = jnp.dtype(b2.dtype).itemsize
    oi = xi

    # VMEM budget: double-buffered blocks + f32 accumulator, with headroom.
    blk_bytes = (2 * (tm * tk * xi + tk * tn * wi + tn * bi + tm * tn * oi)
                 + tm * tn * 4)
    vmem_limit = min(max(int(1.5 * blk_bytes) + (4 << 20), 32 << 20), 48 << 20)

    act_is_trans = act in ("nn.SiLU()", "nn.GELU()", "nn.Tanh()", "nn.Sigmoid()")
    cost = pl.CostEstimate(
        flops=2 * M * N * K,
        transcendentals=M * N if act_is_trans else 0,
        bytes_accessed=(gn * M * K * xi      # x re-streamed once per N panel
                        + gm * K * N * wi    # W re-streamed once per M panel
                        + gm * N * bi
                        + M * N * oi))

    out2d = pl.pallas_call(
        functools.partial(_linear_kernel, act=act, k_rem=k_rem,
                          compute_dtype=compute_dtype),
        out_shape=jax.ShapeDtypeStruct((M, N), x.dtype),
        grid_spec=pltpu.PrefetchScalarGridSpec(
            num_scalar_prefetch=0,
            grid=(gm, gn, gk),
            in_specs=[
                pl.BlockSpec((tm, tk), lambda i, j, k: (i, k)),   # x tile
                pl.BlockSpec((tk, tn), lambda i, j, k: (k, j)),   # W^T tile [K,N]
                pl.BlockSpec((1, tn), lambda i, j, k: (0, j)),    # bias panel
            ],
            out_specs=pl.BlockSpec((tm, tn), lambda i, j, k: (i, j)),
            scratch_shapes=[pltpu.VMEM((tm, tn), jnp.float32)],
        ),
        compiler_params=pltpu.CompilerParams(
            dimension_semantics=("parallel", "parallel", "arbitrary"),
            vmem_limit_bytes=vmem_limit),
        cost_estimate=cost,
    )(x2d, w_kn, b2)

    return out2d.reshape(*lead, N)


def lazy_linear(x, weight, bias, act=None, **kwargs):
    """Convenience entry with PyTorch-layout weight [N, K].

    Transposes the weight per call; for repeated application of the same layer,
    call prepare_linear_params once and use lazy_linear_prepared.
    """
    w_kn, b2 = prepare_linear_params(weight, bias)
    return lazy_linear_prepared(x, w_kn, b2, act, **kwargs)


if __name__ == "__main__":
    key = jax.random.PRNGKey(0)
    kx, kw, kb = jax.random.split(key, 3)

    # Shapes implied by the forward: x = [batch, seq, hidden]; LazyLinear binds
    # in_features to hidden at the first call.
    B, S, K = 2, 8, 32        # in_features lazily bound to 32
    c1 = 16                   # out_features

    x = jax.random.normal(kx, (B, S, K), dtype=jnp.float32)
    # Deterministic synthetic init (stand-in for LazyLinear's kaiming-uniform).
    bound = 1.0 / (K ** 0.5)
    weight = jax.random.uniform(kw, (c1, K), minval=-bound, maxval=bound,
                                dtype=jnp.float32)
    bias = jax.random.uniform(kb, (c1,), minval=-bound, maxval=bound,
                              dtype=jnp.float32)

    # Parameter-bind time: transpose the PyTorch [N, K] weight once to [K, N].
    w_kn, b2 = prepare_linear_params(weight, bias)

    # act=None -> nn.Identity(), same default as the PyTorch module.
    out = jax.block_until_ready(lazy_linear_prepared(x, w_kn, b2, act=None))
    ref = (x.reshape(-1, K) @ weight.T + bias).reshape(B, S, c1)
    assert out.shape == (B, S, c1)
    assert jnp.allclose(out, ref, atol=1e-5, rtol=1e-5)

    # Activation path (e.g. LazyLinear(c1, act="nn.SiLU()")).
    out_silu = jax.block_until_ready(
        lazy_linear_prepared(x, w_kn, b2, act="nn.SiLU()"))
    ref_silu = ref * jax.nn.sigmoid(ref)
    assert jnp.allclose(out_silu, ref_silu, atol=1e-5, rtol=1e-5)

    # Opt-in bf16 MXU path (operands cast in-kernel, f32 accumulation).
    out_bf16 = jax.block_until_ready(
        lazy_linear_prepared(x, w_kn, b2, act=None, compute_dtype=jnp.bfloat16))
    assert jnp.allclose(out_bf16, ref, atol=5e-2, rtol=5e-2)

    # Ragged M / N with a single grid step: no padding copies anywhere.
    B2, S2, K2, N2 = 3, 37, 300, 200
    x2 = jax.random.normal(kx, (B2, S2, K2), dtype=jnp.float32)
    w2 = jax.random.normal(kw, (N2, K2), dtype=jnp.float32) * 0.05
    b2v = jax.random.normal(kb, (N2,), dtype=jnp.float32) * 0.05
    out2 = jax.block_until_ready(lazy_linear(x2, w2, b2v, act="nn.ReLU()"))
    ref2 = jnp.maximum(x2 @ w2.T + b2v, 0.0)
    assert jnp.allclose(out2, ref2, atol=1e-4, rtol=1e-4)

    # Multi-block N, streamed K, and the in-kernel K-tail mask (K % tk != 0).
    B3, S3, K3, N3 = 2, 128, 1300, 640
    x3 = jax.random.normal(kx, (B3, S3, K3), dtype=jnp.float32) * 0.1
    w3 = jax.random.normal(kw, (N3, K3), dtype=jnp.float32) * 0.05
    b3 = jax.random.normal(kb, (N3,), dtype=jnp.float32) * 0.05
    out3 = jax.block_until_ready(lazy_linear(x3, w3, b3, act="nn.GELU()"))
    ref3_lin = jnp.dot(x3.reshape(-1, K3), w3.T,
                       precision=jax.lax.Precision.HIGHEST) + b3
    ref3 = jax.nn.gelu(ref3_lin, approximate=False).reshape(B3, S3, N3)
    assert jnp.allclose(out3, ref3, atol=2e-3, rtol=2e-3)

    print("KERNEL_OK")
</pallas_src>

<mosaic_0001>
module attributes {stable_mosaic.version = 11 : i64} {
  func.func @_linear_kernel(%arg0: i32, %arg1: i32, %arg2: i32, %arg3: memref<16x32xf32, #tpu.memory_space<vmem>>, %arg4: memref<32x16xf32, #tpu.memory_space<vmem>>, %arg5: memref<1x16xf32, #tpu.memory_space<vmem>>, %arg6: memref<16x16xf32, #tpu.memory_space<vmem>>, %arg7: memref<16x16xf32, #tpu.memory_space<vmem>>) attributes {dimension_semantics = [#tpu.dimension_semantics<parallel>, #tpu.dimension_semantics<parallel>, #tpu.dimension_semantics<arbitrary>], iteration_bounds = array<i64: 1, 1, 1>, scalar_prefetch = 0 : i64, scratch_operands = 1 : i64, tpu.core_type = #tpu.core_type<tc>, window_params = [{transform_indices = @transform_0, window_bounds = array<i64: 16, 32>}, {transform_indices = @transform_1, window_bounds = array<i64: 32, 16>}, {transform_indices = @transform_2, window_bounds = array<i64: 1, 16>}, {transform_indices = @transform_3, window_bounds = array<i64: 16, 16>}]} {
    %c0_i32 = arith.constant 0 : i32
    %0 = arith.cmpi eq, %arg2, %c0_i32 : i32
    %1 = arith.extui %0 : i1 to i32
    %c0_i32_0 = arith.constant 0 : i32
    %2 = arith.cmpi ne, %1, %c0_i32_0 : i32
    scf.if %2 {
      %cst = arith.constant 0.000000e+00 : f32
      %9 = vector.broadcast %cst : f32 to vector<16x16xf32>
      %c0 = arith.constant 0 : index
      %c0_5 = arith.constant 0 : index
      %10 = vector.load %arg7[%c0, %c0_5] : memref<16x16xf32, #tpu.memory_space<vmem>>, vector<16x16xf32>
      tpu.vector_store %arg7[%c0, %c0_5], %9 {strides = array<i32>} : memref<16x16xf32, #tpu.memory_space<vmem>>, vector<16x16xf32>,
    } else {
    }
    %c0_i32_1 = arith.constant 0 : i32
    %3 = arith.cmpi slt, %arg2, %c0_i32_1 : i32
    %4 = arith.extui %3 : i1 to i32
    %c0_i32_2 = arith.constant 0 : i32
    %5 = arith.cmpi ne, %4, %c0_i32_2 : i32
    scf.if %5 {
      %c0 = arith.constant 0 : index
      %c0_5 = arith.constant 0 : index
      %9 = vector.load %arg7[%c0, %c0_5] : memref<16x16xf32, #tpu.memory_space<vmem>>, vector<16x16xf32>
      %c0_6 = arith.constant 0 : index
      %c0_7 = arith.constant 0 : index
      %10 = vector.load %arg3[%c0_6, %c0_7] : memref<16x32xf32, #tpu.memory_space<vmem>>, vector<16x32xf32>
      %c0_8 = arith.constant 0 : index
      %c0_9 = arith.constant 0 : index
      %11 = vector.load %arg4[%c0_8, %c0_9] : memref<32x16xf32, #tpu.memory_space<vmem>>, vector<32x16xf32>
      %cst = arith.constant dense<0.000000e+00> : vector<16x16xf32>
      %12 = tpu.matmul %10, %11, %cst {dimension_numbers = #tpu.dot_dimension_numbers<[1], [0], [0], [1], [0, 0, 1, 1], [], []>} : vector<16x32xf32>, vector<32x16xf32>, vector<16x16xf32> -> vector<16x16xf32>
      %13 = arith.addf %9, %12 : vector<16x16xf32>
      %c0_10 = arith.constant 0 : index
      %c0_11 = arith.constant 0 : index
      %14 = vector.load %arg7[%c0_10, %c0_11] : memref<16x16xf32, #tpu.memory_space<vmem>>, vector<16x16xf32>
      tpu.vector_store %arg7[%c0_10, %c0_11], %13 {strides = array<i32>} : memref<16x16xf32, #tpu.memory_space<vmem>>, vector<16x16xf32>,
    } else {
    }
    %c0_i32_3 = arith.constant 0 : i32
    %6 = arith.cmpi eq, %arg2, %c0_i32_3 : i32
    %7 = arith.extui %6 : i1 to i32
    %c0_i32_4 = arith.constant 0 : i32
    %8 = arith.cmpi ne, %7, %c0_i32_4 : i32
    scf.if %8 {
      %c0 = arith.constant 0 : index
      %c0_5 = arith.constant 0 : index
      %9 = vector.load %arg7[%c0, %c0_5] : memref<16x16xf32, #tpu.memory_space<vmem>>, vector<16x16xf32>
      %c0_6 = arith.constant 0 : index
      %c0_7 = arith.constant 0 : index
      %10 = vector.load %arg3[%c0_6, %c0_7] : memref<16x32xf32, #tpu.memory_space<vmem>>, vector<16x32xf32>
      %c0_8 = arith.constant 0 : index
      %c0_9 = arith.constant 0 : index
      %11 = vector.load %arg4[%c0_8, %c0_9] : memref<32x16xf32, #tpu.memory_space<vmem>>, vector<32x16xf32>
      %cst = arith.constant dense<0.000000e+00> : vector<16x16xf32>
      %12 = tpu.matmul %10, %11, %cst {dimension_numbers = #tpu.dot_dimension_numbers<[1], [0], [0], [1], [0, 0, 1, 1], [], []>} : vector<16x32xf32>, vector<32x16xf32>, vector<16x16xf32> -> vector<16x16xf32>
      %13 = arith.addf %9, %12 : vector<16x16xf32>
      %c0_10 = arith.constant 0 : index
      %c0_11 = arith.constant 0 : index
      %14 = vector.load %arg5[%c0_10, %c0_11] : memref<1x16xf32, #tpu.memory_space<vmem>>, vector<1x16xf32>
      %15 = vector.broadcast %14 : vector<1x16xf32> to vector<16x16xf32>
      %16 = arith.addf %13, %15 : vector<16x16xf32>
      %c0_12 = arith.constant 0 : index
      %c0_13 = arith.constant 0 : index
      %17 = vector.load %arg6[%c0_12, %c0_13] : memref<16x16xf32, #tpu.memory_space<vmem>>, vector<16x16xf32>
      tpu.vector_store %arg6[%c0_12, %c0_13], %16 {strides = array<i32>} : memref<16x16xf32, #tpu.memory_space<vmem>>, vector<16x16xf32>,
    } else {
    }
    return
  }
  func.func @transform_0(%arg0: i32, %arg1: i32, %arg2: i32) -> (i32, i32) {
    %c0_i32 = arith.constant 0 : i32
    return %arg0, %arg2 : i32, i32
  }
  func.func @transform_1(%arg0: i32, %arg1: i32, %arg2: i32) -> (i32, i32) {
    %c0_i32 = arith.constant 0 : i32
    return %arg2, %arg1 : i32, i32
  }
  func.func @transform_2(%arg0: i32, %arg1: i32, %arg2: i32) -> (i32, i32) {
    %c0_i32 = arith.constant 0 : i32
    %c0_i32_0 = arith.constant 0 : i32
    return %c0_i32, %arg1 : i32, i32
  }
  func.func @transform_3(%arg0: i32, %arg1: i32, %arg2: i32) -> (i32, i32) {
    %c0_i32 = arith.constant 0 : i32
    return %arg0, %arg1 : i32, i32
  }
}

</mosaic_0001>

<llo_original>
// kernel: tpu_custom_call.1
$region0: #{tpu_custom_call.1}
  #allocation0 [shape = 'u32[]', space=smem, size = 0x4, offset = 0x4, fixed_abs, tag = 'smem constant byte address 0x4 - core index']
  #allocation1 [shape = 'u32[144,128]{1,0:T(1,128)}', space=vmem, size = 0x12000, scoped, tag = 'internal scratch']
  #allocation2 [shape = 'f32[16,16]{1,0:T(8,128)}', space=vmem, size = 0x2000, scoped, tag = 'scratch operand']
  %s0 = inlined_call_operand.vmem [shape: f32[16,32], index: 0, kind: input, shape index: {}]
  %s1 = inlined_call_operand.vmem [shape: f32[32,16], index: 1, kind: input, shape index: {}]
  %s2 = inlined_call_operand.vmem [shape: f32[1,16], index: 2, kind: input, shape index: {}]
  %s3 = inlined_call_operand.hbm [shape: f32[16,16], index: 3, kind: output, shape index: {}]
  %s4 = sld [smem:[#allocation0]]
  $region34: #{tpu_custom_call.1} parent=0
    _
  %s6 = ssub.s32 1, %s4
  %s7 = scalar_select 0, %s6, %s4
  $region1: #{tpu_custom_call.1} parent=0
    #allocation3 [shape = 'u8[8192]{0}', space=vmem, size = 0x2000, scoped, tag = 'output window, operand 0, single buffered']
    #allocation4 [shape = 's32[1]{0}', space=sflag, size = 0x4, scoped, tag = 'scoped memory for tpu_custom_call.1']
    %8 = vsyncpa [#allocation4], 0
    // Predicated region
    $region2: #{tpu_custom_call.1} parent=1 // pred_check
      _
    $region3: #{tpu_custom_call.1} parent=1 // pred_check_branch
      %10 = sbr.rel (0) target = $region5
    $region4: #{tpu_custom_call.1} parent=1 // pred_region
      _
    $region5: #{tpu_custom_call.1} parent=1 // pred_fallthru
      _
    // Predicated region
    $region6: #{tpu_custom_call.1} parent=1 // pred_check
      _
    $region7: #{tpu_custom_call.1} parent=1 // pred_check_branch
      %12 = sbr.rel (0) target = $region9
    $region8: #{tpu_custom_call.1} parent=1 // pred_region
      _
    $region9: #{tpu_custom_call.1} parent=1 // pred_fallthru
      _
    // Predicated region
    $region10: #{tpu_custom_call.1} parent=1 // pred_check
      _
    $region11: #{tpu_custom_call.1} parent=1 // pred_check_branch
      %14 = sbr.rel (0) target = $region13
    $region12: #{tpu_custom_call.1} parent=1 // pred_region
      _
    $region13: #{tpu_custom_call.1} parent=1 // pred_fallthru
      _
    %p15 = scmp.eq.s32.totalorder 0, 0
    // Predicated region
    $region14: #{tpu_custom_call.1} parent=1 // pred_check
      %p16 = pneg %p15
    $region15: #{tpu_custom_call.1} parent=1 // pred_check_branch
      %18 = sbr.rel (%p16) target = $region17
    $region16: #{tpu_custom_call.1} parent=1 // pred_region
      %vm19 = vcmask 130048
      %20 = vst.msk [vmem:[#allocation2] sm:$0xff] %vm19, 0.0
      %21 = vst.msk [vmem:[#allocation2 + $0x8] sm:$0xff] %vm19, 0.0
    $region17: #{tpu_custom_call.1} parent=1 // pred_fallthru
      _
    %p22 = scmp.lt.s32.totalorder 0, 0
    // Predicated region
    $region18: #{tpu_custom_call.1} parent=1 // pred_check
      %p23 = pneg %p22
    $region19: #{tpu_custom_call.1} parent=1 // pred_check_branch
      %25 = sbr.rel (%p23) target = $region21
    $region20: #{tpu_custom_call.1} parent=1 // pred_region
      %v26 = vld [vmem:[#allocation2] sm:$0xff]
      %v27 = vld [vmem:[#allocation2 + $0x8] sm:$0xff]
      %v28 = vld [vmem:[%s0] sm:$0xff]
      %v29 = vld [vmem:[%s0 + $0x8] sm:$0xff]
      %v30 = vld [vmem:[%s1] sm:$0xff]
      %v31 = vld [vmem:[%s1 + $0x8] sm:$0xff]
      %v32 = vld [vmem:[%s1 + $0x10] sm:$0xff]
      %v33 = vld [vmem:[%s1 + $0x18] sm:$0xff]
      %vm34 = vcmask 261120
      %v36 = vsel %vm34, %v28, 0
      %v39 = vsel %vm34, %v29, 0
      %41 = vmatprep.subr.mxu0 0.0
      %42 = vmatpush1.msra.mxu0 0.0
      %43 = vmatprep.subr.mxu0 0.0
      %44 = vmatpush1.msra.mxu0 0.0
      %45 = vmatprep.subr.mxu0 0.0
      %46 = vmatpush1.msra.mxu0 0.0
      %47 = vmatprep.subr.mxu0 0.0
      %48 = vmatpush1.msra.mxu0 0.0
      %49 = vmatprep.subr.mxu0 0.0
      %50 = vmatpush1.msra.mxu0 0.0
      %51 = vmatprep.subr.mxu0 0.0
      %52 = vmatpush1.msra.mxu0 0.0
      %53 = vmatprep.subr.mxu0 0.0
      %54 = vmatpush1.msra.mxu0 0.0
      %55 = vmatprep.subr.mxu0 0.0
      %56 = vmatpush1.msra.mxu0 0.0
      %57 = vmatprep.subr.mxu0 0.0
      %58 = vmatpush1.msra.mxu0 0.0
      %59 = vmatprep.subr.mxu0 0.0
      %60 = vmatpush1.msra.mxu0 0.0
      %61 = vmatprep.subr.mxu0 0.0
      %62 = vmatpush1.msra.mxu0 0.0
      %63 = vmatprep.subr.mxu0 0.0
      %64 = vmatpush1.msra.mxu0 0.0
      %65 = vmatprep.subr.mxu0 0.0
      %66 = vmatpush1.msra.mxu0 %v33
      %67 = vmatprep.subr.mxu0 0.0
      %68 = vmatpush1.msra.mxu0 %v32
      %69 = vmatprep.subr.mxu0 0.0
      %70 = vmatpush1.msra.mxu0 %v31
      %71 = vmatprep.subr.mxu0 0.0
      %72 = vmatpush1.msra.mxu0 %v30
      %73 = vmatprep.subr.mxu0 0.0
      %74 = vmatpush2.msra.mxu0 0.0
      %75 = vmatprep.subr.mxu0 0.0
      %76 = vmatpush2.msra.mxu0 0.0
      %77 = vmatprep.subr.mxu0 0.0
      %78 = vmatpush2.msra.mxu0 0.0
      %79 = vmatprep.subr.mxu0 0.0
      %80 = vmatpush2.msra.mxu0 0.0
      %81 = vmatprep.subr.mxu0 0.0
      %82 = vmatpush2.msra.mxu0 0.0
      %83 = vmatprep.subr.mxu0 0.0
      %84 = vmatpush2.msra.mxu0 0.0
      %85 = vmatprep.subr.mxu0 0.0
      %86 = vmatpush2.msra.mxu0 0.0
      %87 = vmatprep.subr.mxu0 0.0
      %88 = vmatpush2.msra.mxu0 0.0
      %89 = vmatprep.subr.mxu0 0.0
      %90 = vmatpush2.msra.mxu0 0.0
      %91 = vmatprep.subr.mxu0 0.0
      %92 = vmatpush2.msra.mxu0 0.0
      %93 = vmatprep.subr.mxu0 0.0
      %94 = vmatpush2.msra.mxu0 0.0
      %95 = vmatprep.subr.mxu0 0.0
      %96 = vmatpush2.msra.mxu0 0.0
      %97 = vmatprep.subr.mxu0 0.0
      %98 = vmatpush2.msra.mxu0 0.0
      %99 = vmatprep.subr.mxu0 0.0
      %100 = vmatpush2.msra.mxu0 0.0
      %101 = vmatprep.subr.mxu0 0.0
      %102 = vmatpush2.msra.mxu0 0.0
      %103 = vmatprep.subr.mxu0 0.0
      %104 = vmatpush2.msra.mxu0 0.0
      %105 = vmatprep.mubr.f32.mxu0 0.0
      %106 = vmatmul.mubr.f32.gmra.mxu0 %v36
      %v107 = vpop.f32.mrf.mxu0
      %v108 = vadd.f32 0.0, %v107
      %v109 = vpop.f32.mrf.mxu0
      %110 = vmatprep.mubr.f32.mxu0 0.0
      %111 = vmatmul.mubr.f32.gmra.mxu0 %v39
      %v112 = vpop.f32.mrf.mxu0
      %v113 = vadd.f32 0.0, %v112
      %v114 = vpop.f32.mrf.mxu0
      %115 = vdwg.mxu0
      %v116 = vadd.f32 %v26, %v108
      %v117 = vadd.f32 %v27, %v113
      %vm118 = vcmask 130048
      %119 = vst.msk [vmem:[#allocation2] sm:$0xff] %vm118, %v116
      %120 = vst.msk [vmem:[#allocation2 + $0x8] sm:$0xff] %vm118, %v117
    $region21: #{tpu_custom_call.1} parent=1 // pred_fallthru
      _
    // Predicated region
    $region22: #{tpu_custom_call.1} parent=1 // pred_check
      %p121 = pneg %p15
    $region23: #{tpu_custom_call.1} parent=1 // pred_check_branch
      %123 = sbr.rel (%p121) target = $region25
    $region24: #{tpu_custom_call.1} parent=1 // pred_region
      %v124 = vld [vmem:[#allocation2] sm:$0xff]
      %v125 = vld [vmem:[#allocation2 + $0x8] sm:$0xff]
      %v126 = vld [vmem:[%s0] sm:$0xff]
      %v127 = vld [vmem:[%s0 + $0x8] sm:$0xff]
      %v128 = vld [vmem:[%s1] sm:$0xff]
      %v129 = vld [vmem:[%s1 + $0x8] sm:$0xff]
      %v130 = vld [vmem:[%s1 + $0x10] sm:$0xff]
      %v131 = vld [vmem:[%s1 + $0x18] sm:$0xff]
      %vm132 = vcmask 261120
      %v134 = vsel %vm132, %v126, 0
      %v137 = vsel %vm132, %v127, 0
      %139 = vmatprep.subr.mxu0 0.0
      %140 = vmatpush1.msra.mxu0 0.0
      %141 = vmatprep.subr.mxu0 0.0
      %142 = vmatpush1.msra.mxu0 0.0
      %143 = vmatprep.subr.mxu0 0.0
      %144 = vmatpush1.msra.mxu0 0.0
      %145 = vmatprep.subr.mxu0 0.0
      %146 = vmatpush1.msra.mxu0 0.0
      %147 = vmatprep.subr.mxu0 0.0
      %148 = vmatpush1.msra.mxu0 0.0
      %149 = vmatprep.subr.mxu0 0.0
      %150 = vmatpush1.msra.mxu0 0.0
      %151 = vmatprep.subr.mxu0 0.0
      %152 = vmatpush1.msra.mxu0 0.0
      %153 = vmatprep.subr.mxu0 0.0
      %154 = vmatpush1.msra.mxu0 0.0
      %155 = vmatprep.subr.mxu0 0.0
      %156 = vmatpush1.msra.mxu0 0.0
      %157 = vmatprep.subr.mxu0 0.0
      %158 = vmatpush1.msra.mxu0 0.0
      %159 = vmatprep.subr.mxu0 0.0
      %160 = vmatpush1.msra.mxu0 0.0
      %161 = vmatprep.subr.mxu0 0.0
      %162 = vmatpush1.msra.mxu0 0.0
      %163 = vmatprep.subr.mxu0 0.0
      %164 = vmatpush1.msra.mxu0 %v131
      %165 = vmatprep.subr.mxu0 0.0
      %166 = vmatpush1.msra.mxu0 %v130
      %167 = vmatprep.subr.mxu0 0.0
      %168 = vmatpush1.msra.mxu0 %v129
      %169 = vmatprep.subr.mxu0 0.0
      %170 = vmatpush1.msra.mxu0 %v128
      %171 = vmatprep.subr.mxu0 0.0
      %172 = vmatpush2.msra.mxu0 0.0
      %173 = vmatprep.subr.mxu0 0.0
      %174 = vmatpush2.msra.mxu0 0.0
      %175 = vmatprep.subr.mxu0 0.0
      %176 = vmatpush2.msra.mxu0 0.0
      %177 = vmatprep.subr.mxu0 0.0
      %178 = vmatpush2.msra.mxu0 0.0
      %179 = vmatprep.subr.mxu0 0.0
      %180 = vmatpush2.msra.mxu0 0.0
      %181 = vmatprep.subr.mxu0 0.0
      %182 = vmatpush2.msra.mxu0 0.0
      %183 = vmatprep.subr.mxu0 0.0
      %184 = vmatpush2.msra.mxu0 0.0
      %185 = vmatprep.subr.mxu0 0.0
      %186 = vmatpush2.msra.mxu0 0.0
      %187 = vmatprep.subr.mxu0 0.0
      %188 = vmatpush2.msra.mxu0 0.0
      %189 = vmatprep.subr.mxu0 0.0
      %190 = vmatpush2.msra.mxu0 0.0
      %191 = vmatprep.subr.mxu0 0.0
      %192 = vmatpush2.msra.mxu0 0.0
      %193 = vmatprep.subr.mxu0 0.0
      %194 = vmatpush2.msra.mxu0 0.0
      %195 = vmatprep.subr.mxu0 0.0
      %196 = vmatpush2.msra.mxu0 0.0
      %197 = vmatprep.subr.mxu0 0.0
      %198 = vmatpush2.msra.mxu0 0.0
      %199 = vmatprep.subr.mxu0 0.0
      %200 = vmatpush2.msra.mxu0 0.0
      %201 = vmatprep.subr.mxu0 0.0
      %202 = vmatpush2.msra.mxu0 0.0
      %203 = vmatprep.mubr.f32.mxu0 0.0
      %204 = vmatmul.mubr.f32.gmra.mxu0 %v134
      %v205 = vpop.f32.mrf.mxu0
      %v206 = vadd.f32 0.0, %v205
      %v207 = vpop.f32.mrf.mxu0
      %208 = vmatprep.mubr.f32.mxu0 0.0
      %209 = vmatmul.mubr.f32.gmra.mxu0 %v137
      %v210 = vpop.f32.mrf.mxu0
      %v211 = vadd.f32 0.0, %v210
      %v212 = vpop.f32.mrf.mxu0
      %213 = vdwg.mxu0
      %v214 = vadd.f32 %v124, %v206
      %v215 = vadd.f32 %v125, %v211
      %v216 = vld [vmem:[%s2] sm:$0x1]
      %v218 = vlaneseq
      %v219 = vshrl.u32 %v218, 7
      %v220 = vsub.s32 0, %v219
      %v221 = vrot.slane %v216, %v220
      %v223 = vadd.f32 %v214, %v221
      %v224 = vadd.f32 %v215, %v221
      %vm225 = vcmask 130048
      %226 = vst.msk [vmem:[#allocation3] sm:$0xff] %vm225, %v223
      %227 = vst.msk [vmem:[#allocation3 + $0x8] sm:$0xff] %vm225, %v224
    $region25: #{tpu_custom_call.1} parent=1 // pred_fallthru
      _
    // Predicated region
    $region26: #{tpu_custom_call.1} parent=1 // pred_check
      _
    $region27: #{tpu_custom_call.1} parent=1 // pred_check_branch
      %229 = sbr.rel (0) target = $region29
    $region28: #{tpu_custom_call.1} parent=1 // pred_region
      %s231 = ssub.s32 256, 256
      %232 = vsyncadd [#allocation4], %s231
      %s233 = sshll.u32 [#allocation3], 4
      %s234 = int_to_ptr.vmem [resolvable:$true] %s233
      %239 = dma.vmem_to_hbm [thread:$0]  %s234, 256, %s3, [#allocation4], 128, 128, 8
    $region29: #{tpu_custom_call.1} parent=1 // pred_fallthru
      _
    // Predicated region
    $region30: #{tpu_custom_call.1} parent=1 // pred_check
      _
    $region31: #{tpu_custom_call.1} parent=1 // pred_check_branch
      %241 = sbr.rel (0) target = $region33
    $region32: #{tpu_custom_call.1} parent=1 // pred_region
      %242 = dma.done [#allocation4], 256
    $region33: #{tpu_custom_call.1} parent=1 // pred_fallthru
      _
    %243 = vsyncpa [#allocation4], 1

</llo_original>
